<compile_context>
chip_gen: v6e
topology: v6e:2x2x1
jax: 0.10.0
libtpu: 0.0.40
codegen_flags: <defaults>
</compile_context>

<pallas_src>
import jax
import jax.numpy as jnp
import numpy as np
from jax.experimental import pallas as pl
from jax.experimental.pallas import tpu as pltpu

_LANE = 128
_SUBLANE = 8
_TARGET_BLOCK_BYTES = 4 * 1024 * 1024    # per-operand block; 2 bufs x (in+out) = 16 MiB pipeline
_MAX_BLOCK_WIDTH = 16384                 # cap on lane-dim block when a native row is very wide
_VMEM_LIMIT_BYTES = 48 * 1024 * 1024     # explicit scoped-VMEM (v5e default is only 16 MiB)


def _round_down(v, m):
    return (v // m) * m


def _make_kernel(scale, offset, bins, out_dtype):
    # Compile-time Python scalars -> the kernel captures NO traced jax-array constants.
    scale_f = float(np.float32(scale))
    inv_scale_f = float(np.float32(1.0) / np.float32(scale))   # ATen uses the f32 reciprocal
    zp_f = float(np.float32(offset))
    qmax_f = float(np.float32(bins))

    def kernel(x_ref, o_ref):
        x = x_ref[...].astype(jnp.float32)
        # fake_quantize_per_tensor_affine (jnp.round == round-half-to-even == nearbyint)
        q = jnp.clip(jnp.round(x * inv_scale_f + zp_f), 0.0, qmax_f)
        y = (q - zp_f) * scale_f
        # module re-scale: y / scale + offset (kept literal; VPU/EUP work is free, HBM-bound)
        o_ref[...] = (y / scale_f + zp_f).astype(out_dtype)

    return kernel


def _compiler_params(n_axes):
    return pltpu.CompilerParams(
        dimension_semantics=("parallel",) * n_axes,
        vmem_limit_bytes=_VMEM_LIMIT_BYTES,
    )


def _quant_2d(x2d, kernel, out_dtype, cost, alias):
    rows, width = x2d.shape
    itemsize = max(jnp.dtype(x2d.dtype).itemsize, jnp.dtype(out_dtype).itemsize)

    block_w = width if width <= _MAX_BLOCK_WIDTH else _MAX_BLOCK_WIDTH
    block_r = max(1, _TARGET_BLOCK_BYTES // (block_w * itemsize))
    if rows > _SUBLANE:
        # Guarantee >=2 grid steps along rows so v7x can shard across both TensorCores.
        block_r = min(block_r, max(_SUBLANE, _round_down(rows // 2, _SUBLANE)))
    if block_r >= rows:
        block_r = rows                                    # single full-row block (tiny inputs)
    else:
        block_r = max(_SUBLANE, _round_down(block_r, _SUBLANE))

    grid = (pl.cdiv(rows, block_r), pl.cdiv(width, block_w))
    return pl.pallas_call(
        kernel,
        out_shape=jax.ShapeDtypeStruct((rows, width), out_dtype),
        grid=grid,
        in_specs=[pl.BlockSpec((block_r, block_w), lambda i, j: (i, j))],
        out_specs=pl.BlockSpec((block_r, block_w), lambda i, j: (i, j)),
        compiler_params=_compiler_params(2),
        cost_estimate=cost,
        input_output_aliases=alias,
    )(x2d)


def _quant_1d(flat, kernel, out_dtype, cost, alias):
    # Ragged element counts: 1-D grid; Pallas masks the partial last block (no pad copy).
    (n,) = flat.shape
    itemsize = max(jnp.dtype(flat.dtype).itemsize, jnp.dtype(out_dtype).itemsize)
    chunk = _SUBLANE * _LANE                              # 1024: keeps blocks vreg-aligned
    block_n = max(chunk, _round_down(_TARGET_BLOCK_BYTES // itemsize, chunk))
    if n > 2 * chunk:
        # >=2 grid steps where possible (megacore on v7x).
        block_n = min(block_n, max(chunk, _round_down(n // 2, chunk)))
    if block_n >= n:
        block_n = n                                       # single full block

    grid = (pl.cdiv(n, block_n),)
    return pl.pallas_call(
        kernel,
        out_shape=jax.ShapeDtypeStruct((n,), out_dtype),
        grid=grid,
        in_specs=[pl.BlockSpec((block_n,), lambda i: (i,))],
        out_specs=pl.BlockSpec((block_n,), lambda i: (i,)),
        compiler_params=_compiler_params(1),
        cost_estimate=cost,
        input_output_aliases=alias,
    )(flat)


def linear_quant(x, bins, scale, offset, *, donate=False):
    """LinearQuant.forward(x). Returns an array of x's shape (f32 for float inputs)."""
    assert float(bins) < float(1 << 24), "bins must be exactly representable in f32"

    orig_shape = x.shape
    out_dtype = jnp.promote_types(x.dtype, jnp.float32)   # torch promotes by the f32 scale buffer
    n = int(x.size)
    if n == 0:
        return jnp.zeros(orig_shape, out_dtype)

    kernel = _make_kernel(float(scale), float(offset), float(bins), out_dtype)
    cost = pl.CostEstimate(
        flops=8 * n,
        transcendentals=0,
        bytes_accessed=n * (jnp.dtype(x.dtype).itemsize + jnp.dtype(out_dtype).itemsize),
    )
    # In-place fake-quant when the caller donates x and dtypes match.
    alias = {0: 0} if (donate and jnp.dtype(x.dtype) == jnp.dtype(out_dtype)) else {}

    if x.ndim >= 2 and orig_shape[-1] % _LANE == 0:
        # Lane-dense trailing dim: collapse only the leading dims (layout-preserving
        # reshape -> no HBM relayout copy around the kernel).
        out = _quant_2d(x.reshape(-1, orig_shape[-1]), kernel, out_dtype, cost, alias)
    else:
        # Lane-sparse trailing dim: flatten (this reshape may relayout once in HBM, which
        # is unavoidable for tiled layouts) and pick the widest lane-dense dividing width.
        flat = x.reshape(-1)
        width = next((w for w in (4096, 2048, 1024, 512, 256, 128) if n % w == 0), None)
        if width is not None:
            out = _quant_2d(flat.reshape(-1, width), kernel, out_dtype, cost, alias)
        else:
            out = _quant_1d(flat, kernel, out_dtype, cost, alias)

    return out.reshape(orig_shape)


def _reference(x, bins, scale, offset):
    """Pure-JAX transcription of the PyTorch forward (fake_quant -> /scale + offset)."""
    xf = x.astype(jnp.float32)
    scale_f = jnp.float32(scale)
    zp = jnp.float32(offset)
    q = jnp.clip(jnp.round(xf * (jnp.float32(1.0) / scale_f) + zp), 0.0, jnp.float32(bins))
    y = (q - zp) * scale_f
    return y / scale_f + zp


# TODO(synk): the custom STE backward of fake_quant is not implemented (forward-only kernel).

if __name__ == "__main__":
    # Module buffers (deterministic, in-script): LinearQuant(bins=255, scale=0.05, offset=8)
    bins, scale, offset = 255, 0.05, 8

    key = jax.random.PRNGKey(0)
    x = jax.random.normal(key, (2, 4, 16, 16), dtype=jnp.float32) * 3.0   # NCHW activations

    y = jax.block_until_ready(linear_quant(x, bins, scale, offset))
    y_ref = _reference(x, bins, scale, offset)
    assert y.shape == x.shape and y.dtype == y_ref.dtype
    assert jnp.allclose(y, y_ref, atol=1e-4, rtol=1e-5), "mismatch vs reference (main path)"

    # Extra coverage: layout-preserving lane-dense path and the ragged 1-D path.
    x2 = jax.random.normal(jax.random.PRNGKey(1), (2, 8, 256), dtype=jnp.float32) * 3.0
    y2 = jax.block_until_ready(linear_quant(x2, bins, scale, offset))
    assert jnp.allclose(y2, _reference(x2, bins, scale, offset), atol=1e-4, rtol=1e-5)

    x3 = jax.random.normal(jax.random.PRNGKey(2), (3, 5, 7), dtype=jnp.float32) * 3.0
    y3 = jax.block_until_ready(linear_quant(x3, bins, scale, offset))
    assert jnp.allclose(y3, _reference(x3, bins, scale, offset), atol=1e-4, rtol=1e-5)

    print("KERNEL_OK")
</pallas_src>

<mosaic_0001>
module attributes {stable_mosaic.version = 11 : i64} {
  func.func @kernel(%arg0: i32, %arg1: i32, %arg2: memref<1x2048xf32, #tpu.memory_space<vmem>>, %arg3: memref<1x2048xf32, #tpu.memory_space<vmem>>) attributes {dimension_semantics = [#tpu.dimension_semantics<parallel>, #tpu.dimension_semantics<parallel>], iteration_bounds = array<i64: 1, 1>, scalar_prefetch = 0 : i64, scratch_operands = 0 : i64, tpu.core_type = #tpu.core_type<tc>, window_params = [{transform_indices = @transform_0, window_bounds = array<i64: 1, 2048>}, {transform_indices = @transform_1, window_bounds = array<i64: 1, 2048>}]} {
    %c0 = arith.constant 0 : index
    %c0_0 = arith.constant 0 : index
    %0 = vector.load %arg2[%c0, %c0_0] : memref<1x2048xf32, #tpu.memory_space<vmem>>, vector<1x2048xf32>
    %cst = arith.constant 2.000000e+01 : f32
    %1 = vector.broadcast %cst : f32 to vector<1x2048xf32>
    %2 = arith.mulf %0, %1 : vector<1x2048xf32>
    %cst_1 = arith.constant 8.000000e+00 : f32
    %3 = vector.broadcast %cst_1 : f32 to vector<1x2048xf32>
    %4 = arith.addf %2, %3 : vector<1x2048xf32>
    %5 = math.roundeven %4 : vector<1x2048xf32>
    %cst_2 = arith.constant 0.000000e+00 : f32
    %cst_3 = arith.constant 2.550000e+02 : f32
    %6 = vector.broadcast %cst_2 : f32 to vector<1x2048xf32>
    %7 = arith.maximumf %6, %5 : vector<1x2048xf32>
    %8 = vector.broadcast %cst_3 : f32 to vector<1x2048xf32>
    %9 = arith.minimumf %8, %7 : vector<1x2048xf32>
    %cst_4 = arith.constant 8.000000e+00 : f32
    %10 = vector.broadcast %cst_4 : f32 to vector<1x2048xf32>
    %11 = arith.subf %9, %10 : vector<1x2048xf32>
    %cst_5 = arith.constant 5.000000e-02 : f32
    %12 = vector.broadcast %cst_5 : f32 to vector<1x2048xf32>
    %13 = arith.mulf %11, %12 : vector<1x2048xf32>
    %cst_6 = arith.constant 5.000000e-02 : f32
    %14 = vector.broadcast %cst_6 : f32 to vector<1x2048xf32>
    %15 = arith.divf %13, %14 : vector<1x2048xf32>
    %cst_7 = arith.constant 8.000000e+00 : f32
    %16 = vector.broadcast %cst_7 : f32 to vector<1x2048xf32>
    %17 = arith.addf %15, %16 : vector<1x2048xf32>
    %c0_8 = arith.constant 0 : index
    %c0_9 = arith.constant 0 : index
    %18 = vector.load %arg3[%c0_8, %c0_9] : memref<1x2048xf32, #tpu.memory_space<vmem>>, vector<1x2048xf32>
    tpu.vector_store %arg3[%c0_8, %c0_9], %17 {strides = array<i32>} : memref<1x2048xf32, #tpu.memory_space<vmem>>, vector<1x2048xf32>,
    return
  }
  func.func @transform_0(%arg0: i32, %arg1: i32) -> (i32, i32) {
    %c0_i32 = arith.constant 0 : i32
    return %arg0, %arg1 : i32, i32
  }
  func.func @transform_1(%arg0: i32, %arg1: i32) -> (i32, i32) {
    %c0_i32 = arith.constant 0 : i32
    return %arg0, %arg1 : i32, i32
  }
}

</mosaic_0001>

<llo_original>
// kernel: tpu_custom_call.1
$region0: #{tpu_custom_call.1}
  #allocation0 [shape = 'u32[]', space=smem, size = 0x4, offset = 0x4, fixed_abs, tag = 'smem constant byte address 0x4 - core index']
  #allocation1 [shape = 'u32[144,128]{1,0:T(1,128)}', space=vmem, size = 0x12000, scoped, tag = 'internal scratch']
  %s0 = inlined_call_operand.hbm [shape: f32[1,2048], index: 0, kind: input, shape index: {}]
  %s1 = inlined_call_operand.hbm [shape: f32[1,2048], index: 1, kind: output, shape index: {}]
  %s2 = sld [smem:[#allocation0]]
  $region18: #{tpu_custom_call.1} parent=0
    _
  %s4 = ssub.s32 1, %s2
  %s5 = scalar_select 0, %s4, %s2
  $region1: #{tpu_custom_call.1} parent=0
    #allocation2 [shape = 'u8[8192]{0}', space=vmem, size = 0x2000, scoped, tag = 'input window, operand 0, single buffered']
    #allocation3 [shape = 's32[1]{0}', space=sflag, size = 0x4, scoped, tag = 'scoped memory for tpu_custom_call.1']
    #allocation4 [shape = 's32[1]{0}', space=sflag, size = 0x4, scoped, tag = 'scoped memory for tpu_custom_call.1']
    #allocation5 [shape = 'u8[8192]{0}', space=vmem, size = 0x2000, scoped, tag = 'output window, operand 0, single buffered']
    %6 = vsyncpa [#allocation3], 0
    %7 = vsyncpa [#allocation4], 0
    // Predicated region
    $region2: #{tpu_custom_call.1} parent=1 // pred_check
      _
    $region3: #{tpu_custom_call.1} parent=1 // pred_check_branch
      %9 = sbr.rel (0) target = $region5
    $region4: #{tpu_custom_call.1} parent=1 // pred_region
      %s11 = ssub.s32 256, 256
      %12 = vsyncadd [#allocation3], %s11
      %s14 = sshll.u32 [#allocation2], 4
      %s15 = int_to_ptr.vmem [resolvable:$true] %s14
      %17 = dma.hbm_to_vmem [thread:$0]  %s0, 256, %s15, [#allocation3]
    $region5: #{tpu_custom_call.1} parent=1 // pred_fallthru
      _
    // Predicated region
    $region6: #{tpu_custom_call.1} parent=1 // pred_check
      _
    $region7: #{tpu_custom_call.1} parent=1 // pred_check_branch
      %19 = sbr.rel (0) target = $region9
    $region8: #{tpu_custom_call.1} parent=1 // pred_region
      %20 = dma.done [#allocation3], 256
    $region9: #{tpu_custom_call.1} parent=1 // pred_fallthru
      _
    %v21 = vld [vmem:[#allocation2] sm:$0xff]
    %v22 = vld [vmem:[#allocation2 + $0x8] sm:$0xff]
    %v23 = vmul.f32 %v21, 20.0
    %v24 = vmul.f32 %v22, 20.0
    %v25 = vadd.f32 %v23, 8.0
    %v26 = vadd.f32 %v24, 8.0
    %v27 = vround.ne.pseudo %v25
    %v28 = vround.ne.pseudo %v26
    %v29 = vmax.f32 %v27, 0.0
    %v30 = vmax.f32 %v28, 0.0
    %v31 = vmin.f32 %v29, 255.0
    %v32 = vmin.f32 %v30, 255.0
    %v33 = vsub.f32 %v31, 8.0
    %v34 = vsub.f32 %v32, 8.0
    %v35 = vmul.f32 %v33, 0.05
    %v36 = vmul.f32 %v34, 0.05
    %v37 = vrcp.pop 0.05
    %v38 = vmul.f32 %v35, %v37
    %v39 = vmul.f32 %v36, %v37
    %v40 = vadd.f32 %v38, 8.0
    %v41 = vadd.f32 %v39, 8.0
    %42 = vst [vmem:[#allocation5] sm:$0xff] %v40
    %43 = vst [vmem:[#allocation5 + $0x8] sm:$0xff] %v41
    // Predicated region
    $region10: #{tpu_custom_call.1} parent=1 // pred_check
      _
    $region11: #{tpu_custom_call.1} parent=1 // pred_check_branch
      %45 = sbr.rel (0) target = $region13
    $region12: #{tpu_custom_call.1} parent=1 // pred_region
      %s47 = ssub.s32 256, 256
      %48 = vsyncadd [#allocation4], %s47
      %s50 = sshll.u32 [#allocation5], 4
      %s51 = int_to_ptr.vmem [resolvable:$true] %s50
      %53 = dma.vmem_to_hbm [thread:$0]  %s51, 256, %s1, [#allocation4]
    $region13: #{tpu_custom_call.1} parent=1 // pred_fallthru
      _
    // Predicated region
    $region14: #{tpu_custom_call.1} parent=1 // pred_check
      _
    $region15: #{tpu_custom_call.1} parent=1 // pred_check_branch
      %55 = sbr.rel (0) target = $region17
    $region16: #{tpu_custom_call.1} parent=1 // pred_region
      %56 = dma.done [#allocation4], 256
    $region17: #{tpu_custom_call.1} parent=1 // pred_fallthru
      _
    %57 = vsyncpa [#allocation3], 1
    %58 = vsyncpa [#allocation4], 1

</llo_original>
